<compile_context>
chip_gen: v7x
topology: tpu7x:2x2x1
jax: 0.10.0
libtpu: 0.0.40
codegen_flags: <defaults>
</compile_context>

<pallas_src>
import functools
from typing import NamedTuple

import jax
import jax.numpy as jnp
import numpy as np
from jax.experimental import pallas as pl
from jax.experimental.pallas import tpu as pltpu


# ---------------------------------------------------------------------------
# Small helpers
# ---------------------------------------------------------------------------
def _cdiv(a, b):
    return (a + b - 1) // b


def _round_up(v, m):
    return _cdiv(v, m) * m


def _vmem_capacity_bytes():
    """Physical per-core VMEM; conservative fallback (v7x = 64 MiB)."""
    try:
        return int(pltpu.get_tpu_info().vmem_capacity_bytes)
    except Exception:
        return 64 << 20


def _maybe_buffered_spec(block_shape, index_map, depth):
    """BlockSpec with deeper pipelining if the API supports it."""
    if hasattr(pl, "Buffered"):
        try:
            return pl.BlockSpec(block_shape, index_map,
                                pipeline_mode=pl.Buffered(depth))
        except TypeError:
            pass
    return pl.BlockSpec(block_shape, index_map)


# ---------------------------------------------------------------------------
# Kernels
# ---------------------------------------------------------------------------
def _dense_kernel_single(x_ref, w_ref, b_ref, o_ref, *, scale, neg_slope):
    """No K-reduction grid: one MXU dot + fused wscale/bias/lrelu epilogue."""
    y = jnp.dot(x_ref[...], w_ref[...], preferred_element_type=jnp.float32)
    y = y * scale + b_ref[...]                       # bias already * lr_multiplier
    o_ref[...] = jnp.where(y >= 0.0, y, y * neg_slope)


def _dense_kernel_tiled(x_ref, w_ref, b_ref, o_ref, *, scale, neg_slope):
    """K tiled on the innermost grid axis; f32 output block is the accumulator."""
    k = pl.program_id(2)

    @pl.when(k == 0)
    def _():
        o_ref[...] = jnp.zeros_like(o_ref)

    o_ref[...] += jnp.dot(x_ref[...], w_ref[...],
                          preferred_element_type=jnp.float32)

    @pl.when(k == pl.num_programs(2) - 1)
    def _():
        y = o_ref[...] * scale + b_ref[...]
        o_ref[...] = jnp.where(y >= 0.0, y, y * neg_slope)


# ---------------------------------------------------------------------------
# One-time parameter preparation (hoisted weight transform)
# ---------------------------------------------------------------------------
class DenseBlockParams(NamedTuple):
    w_t: jax.Array       # [K_pad, N_pad] bf16 (transposed, padded) weight
    bias: jax.Array      # [1, N_pad] f32, pre-scaled by lr_multiplier
    scale: float         # wscale gain / sqrt(fan_in) * lr_multiplier
    in_features: int     # K (unpadded)
    out_features: int    # N (unpadded)
    tk: int              # K tile
    tn: int              # N tile


def prepare_dense_block_params(weight, bias, *,
                               wscale_gain=np.sqrt(2.0),
                               wscale_lr_multiplier=0.01,
                               tk_cap=None, tn_cap=1024):
    """One-time weight transform: transpose + bf16 cast + pad + tile choice.

    Call once at parameter-init time; the per-call forward then streams the
    weight exactly once from HBM with no transpose/cast/pad copies.
    weight: [N, K] (PyTorch nn.Linear layout), bias: [N].
    """
    N, K = weight.shape
    # WScaleLayer with kernel_size=1 -> fan_in = in_channels (unpadded K).
    scale = float(wscale_gain / np.sqrt(K) * wscale_lr_multiplier)

    vmem = _vmem_capacity_bytes()
    if tk_cap is None:
        # Larger K tiles on 128 MiB VMEM chips (v5e/v6e); smaller on 64 MiB (v7x).
        tk_cap = 4096 if vmem >= (100 << 20) else 2048

    K128 = _round_up(K, 128)
    N128 = _round_up(N, 128)

    # K (reduction): as few, as large 128-aligned tiles as possible.
    n_k = max(1, _cdiv(K128, tk_cap))
    tk = _round_up(_cdiv(K128, n_k), 128)
    K_pad = n_k * tk

    # N (parallel): at least 2 blocks whenever N_pad >= 256 so v7x's two
    # TensorCores both stream weights (harmless serial split on v5e/v6e).
    want_n_blocks = 2 if N128 >= 256 else 1
    n_n = max(want_n_blocks, _cdiv(N128, tn_cap))
    tn = _round_up(_cdiv(N128, n_n), 128)
    N_pad = n_n * tn

    w_t = jnp.asarray(weight).T.astype(jnp.bfloat16)          # [K, N]
    w_t = jnp.pad(w_t, ((0, K_pad - K), (0, N_pad - N)))
    b2 = (jnp.asarray(bias).astype(jnp.float32)
          * wscale_lr_multiplier).reshape(1, N)
    b2 = jnp.pad(b2, ((0, 0), (0, N_pad - N)))

    return DenseBlockParams(w_t=w_t, bias=b2, scale=scale,
                            in_features=K, out_features=N, tk=tk, tn=tn)


# ---------------------------------------------------------------------------
# Forward (per-call path: only x is cast/padded; weight is already prepared)
# ---------------------------------------------------------------------------
def dense_block_apply(x, params: DenseBlockParams, *, activation_type="lrelu"):
    """Pallas forward for DenseBlock given pre-transformed params."""
    B = x.shape[0]
    x2 = x.reshape(B, -1)
    K = params.in_features
    N = params.out_features
    assert x2.shape[1] == K, (x2.shape, K)

    K_pad, N_pad = params.w_t.shape
    tk, tn = params.tk, params.tn
    n_k = K_pad // tk
    n_n = N_pad // tn

    neg_slope = 0.2 if activation_type == "lrelu" else 1.0   # 'linear' -> identity

    # B (M) axis: keep one resident row block at small batch; tile at 256 rows
    # (parallel) for large batches so VMEM stays bounded and the MXU stays fed.
    if B > 256:
        tm = 256
        n_m = _cdiv(B, tm)
        B_pad = n_m * tm
    else:
        tm, n_m, B_pad = B, 1, B

    # bf16 activations (tiny vs. the weight stream); f32 accumulation in-kernel.
    x_bf = x2.astype(jnp.bfloat16)
    if K_pad != K or B_pad != B:
        x_bf = jnp.pad(x_bf, ((0, B_pad - B), (0, K_pad - K)))

    # VMEM budget with headroom; clamp to 75% of physical VMEM (v7x = 64 MiB).
    nbuf_w = 3 if n_k > 1 else 2
    vmem_need = (2 * tm * tk * 2            # bf16 x tiles (double-buffered)
                 + nbuf_w * tk * tn * 2     # bf16 weight tiles
                 + 2 * tm * tn * 4          # f32 output tiles
                 + 2 * tn * 4               # bias
                 + (2 << 20))
    vmem_cap = _vmem_capacity_bytes()
    vmem_limit = int(min(max(2 * vmem_need, 32 << 20), int(0.75 * vmem_cap)))

    cost = pl.CostEstimate(
        flops=2 * B_pad * K_pad * N_pad,
        transcendentals=0,
        bytes_accessed=(B_pad * K_pad * 2 + K_pad * N_pad * 2
                        + N_pad * 4 + B_pad * N_pad * 4),
    )

    out_shape = jax.ShapeDtypeStruct((B_pad, N_pad), jnp.float32)

    if n_k == 1:
        # Small-weight fast path: no reduction grid, no accumulator bookkeeping.
        kernel = functools.partial(_dense_kernel_single,
                                   scale=params.scale, neg_slope=neg_slope)
        out = pl.pallas_call(
            kernel,
            out_shape=out_shape,
            grid_spec=pltpu.PrefetchScalarGridSpec(
                num_scalar_prefetch=0,
                grid=(n_m, n_n),
                in_specs=[
                    pl.BlockSpec((tm, K_pad), lambda i, j: (i, 0)),   # x rows
                    pl.BlockSpec((K_pad, tn), lambda i, j: (0, j)),   # W.T tile
                    pl.BlockSpec((1, tn), lambda i, j: (0, j)),       # bias tile
                ],
                out_specs=pl.BlockSpec((tm, tn), lambda i, j: (i, j)),
            ),
            compiler_params=pltpu.CompilerParams(
                dimension_semantics=("parallel", "parallel"),
                vmem_limit_bytes=vmem_limit,
            ),
            cost_estimate=cost,
        )(x_bf, params.w_t, params.bias)
    else:
        kernel = functools.partial(_dense_kernel_tiled,
                                   scale=params.scale, neg_slope=neg_slope)
        w_spec = _maybe_buffered_spec((tk, tn), lambda i, j, k: (k, j), depth=3)
        out = pl.pallas_call(
            kernel,
            out_shape=out_shape,
            grid_spec=pltpu.PrefetchScalarGridSpec(
                num_scalar_prefetch=0,
                grid=(n_m, n_n, n_k),
                in_specs=[
                    pl.BlockSpec((tm, tk), lambda i, j, k: (i, k)),   # x K-tile
                    w_spec,                                           # W.T tile
                    pl.BlockSpec((1, tn), lambda i, j, k: (0, j)),    # bias tile
                ],
                out_specs=pl.BlockSpec((tm, tn), lambda i, j, k: (i, j)),
            ),
            compiler_params=pltpu.CompilerParams(
                dimension_semantics=("parallel", "parallel", "arbitrary"),
                vmem_limit_bytes=vmem_limit,
            ),
            cost_estimate=cost,
        )(x_bf, params.w_t, params.bias)

    if B_pad != B or N_pad != N:
        out = out[:B, :N]
    return out


def dense_block(x, weight, bias, *,
                wscale_gain=np.sqrt(2.0),
                wscale_lr_multiplier=0.01,
                activation_type="lrelu"):
    """Convenience one-shot API (prep + apply).  For repeated forwards, call
    prepare_dense_block_params() once and dense_block_apply() per step."""
    params = prepare_dense_block_params(
        weight, bias, wscale_gain=wscale_gain,
        wscale_lr_multiplier=wscale_lr_multiplier)
    return dense_block_apply(x, params, activation_type=activation_type)


# ---------------------------------------------------------------------------
# Pure-JAX f32 reference mirroring the PyTorch forward
# ---------------------------------------------------------------------------
def dense_block_ref(x, weight, bias, *,
                    wscale_gain=np.sqrt(2.0),
                    wscale_lr_multiplier=0.01,
                    activation_type="lrelu"):
    B = x.shape[0]
    x2 = x.reshape(B, -1).astype(jnp.float32)
    K = x2.shape[1]
    scale = wscale_gain / np.sqrt(K) * wscale_lr_multiplier
    y = x2 @ weight.T.astype(jnp.float32)
    y = y * scale + bias.reshape(1, -1) * wscale_lr_multiplier
    if activation_type == "lrelu":
        y = jnp.where(y >= 0.0, y, 0.2 * y)
    return y


if __name__ == "__main__":
    key = jax.random.PRNGKey(0)
    kx, kw, kb = jax.random.split(key, 3)

    # Input consistent with DenseBlock usage: 4-D input is flattened in forward.
    B, C, H, W = 2, 4, 16, 16
    in_channels = C * H * W          # 1024
    out_channels = 256

    x = jax.random.normal(kx, (B, C, H, W), dtype=jnp.float32)

    # nn.Linear weight [out, in], deterministic init (uniform like PyTorch default).
    bound = 1.0 / np.sqrt(in_channels)
    weight = jax.random.uniform(kw, (out_channels, in_channels),
                                minval=-bound, maxval=bound, dtype=jnp.float32)
    # WScaleLayer bias is zero-initialized in the module; use tiny values so the
    # bias path is actually exercised.
    bias = 0.01 * jax.random.normal(kb, (out_channels,), dtype=jnp.float32)

    ref = dense_block_ref(x, weight, bias)

    # --- Path 1: default tiling (K fits one tile -> single-shot fast path) ---
    params = prepare_dense_block_params(weight, bias)       # one-time weight prep
    out = jax.block_until_ready(dense_block_apply(x, params))
    np.testing.assert_allclose(np.asarray(out), np.asarray(ref),
                               rtol=2e-2, atol=1e-4)

    # --- Path 2: force K tiling (exercises the accumulator/epilogue path) ---
    params_tiled = prepare_dense_block_params(weight, bias, tk_cap=512)
    out2 = jax.block_until_ready(dense_block_apply(x, params_tiled))
    np.testing.assert_allclose(np.asarray(out2), np.asarray(ref),
                               rtol=2e-2, atol=1e-4)

    print("KERNEL_OK")
</pallas_src>

<mosaic_0001>
module attributes {stable_mosaic.version = 11 : i64} {
  func.func @_dense_kernel_single(%arg0: i32, %arg1: i32, %arg2: memref<2x1024xbf16, #tpu.memory_space<vmem>>, %arg3: memref<1024x128xbf16, #tpu.memory_space<vmem>>, %arg4: memref<1x128xf32, #tpu.memory_space<vmem>>, %arg5: memref<2x128xf32, #tpu.memory_space<vmem>>) attributes {dimension_semantics = [#tpu.dimension_semantics<parallel>, #tpu.dimension_semantics<parallel>], iteration_bounds = array<i64: 1, 2>, scalar_prefetch = 0 : i64, scratch_operands = 0 : i64, tpu.core_type = #tpu.core_type<tc>, window_params = [{transform_indices = @transform_0, window_bounds = array<i64: 2, 1024>}, {transform_indices = @transform_1, window_bounds = array<i64: 1024, 128>}, {transform_indices = @transform_2, window_bounds = array<i64: 1, 128>}, {transform_indices = @transform_3, window_bounds = array<i64: 2, 128>}]} {
    %c0 = arith.constant 0 : index
    %c0_0 = arith.constant 0 : index
    %0 = vector.load %arg2[%c0, %c0_0] : memref<2x1024xbf16, #tpu.memory_space<vmem>>, vector<2x1024xbf16>
    %c0_1 = arith.constant 0 : index
    %c0_2 = arith.constant 0 : index
    %1 = vector.load %arg3[%c0_1, %c0_2] : memref<1024x128xbf16, #tpu.memory_space<vmem>>, vector<1024x128xbf16>
    %cst = arith.constant dense<0.000000e+00> : vector<2x128xf32>
    %2 = tpu.matmul %0, %1, %cst {dimension_numbers = #tpu.dot_dimension_numbers<[1], [0], [0], [1], [0, 0, 1, 1], [], []>} : vector<2x1024xbf16>, vector<1024x128xbf16>, vector<2x128xf32> -> vector<2x128xf32>
    %cst_3 = arith.constant 4.41941724E-4 : f32
    %3 = vector.broadcast %cst_3 : f32 to vector<2x128xf32>
    %4 = arith.mulf %2, %3 : vector<2x128xf32>
    %c0_4 = arith.constant 0 : index
    %c0_5 = arith.constant 0 : index
    %5 = vector.load %arg4[%c0_4, %c0_5] : memref<1x128xf32, #tpu.memory_space<vmem>>, vector<1x128xf32>
    %6 = vector.broadcast %5 : vector<1x128xf32> to vector<2x128xf32>
    %7 = arith.addf %4, %6 : vector<2x128xf32>
    %cst_6 = arith.constant 0.000000e+00 : f32
    %8 = vector.broadcast %cst_6 : f32 to vector<2x128xf32>
    %9 = arith.cmpf oge, %7, %8 : vector<2x128xf32>
    %cst_7 = arith.constant 2.000000e-01 : f32
    %10 = vector.broadcast %cst_7 : f32 to vector<2x128xf32>
    %11 = arith.mulf %7, %10 : vector<2x128xf32>
    %12 = arith.select %9, %7, %11 : vector<2x128xi1>, vector<2x128xf32>
    %c0_8 = arith.constant 0 : index
    %c0_9 = arith.constant 0 : index
    %13 = vector.load %arg5[%c0_8, %c0_9] : memref<2x128xf32, #tpu.memory_space<vmem>>, vector<2x128xf32>
    tpu.vector_store %arg5[%c0_8, %c0_9], %12 {strides = array<i32>} : memref<2x128xf32, #tpu.memory_space<vmem>>, vector<2x128xf32>,
    return
  }
  func.func @transform_0(%arg0: i32, %arg1: i32) -> (i32, i32) {
    %c0_i32 = arith.constant 0 : i32
    %c0_i32_0 = arith.constant 0 : i32
    return %arg0, %c0_i32 : i32, i32
  }
  func.func @transform_1(%arg0: i32, %arg1: i32) -> (i32, i32) {
    %c0_i32 = arith.constant 0 : i32
    %c0_i32_0 = arith.constant 0 : i32
    return %c0_i32, %arg1 : i32, i32
  }
  func.func @transform_2(%arg0: i32, %arg1: i32) -> (i32, i32) {
    %c0_i32 = arith.constant 0 : i32
    %c0_i32_0 = arith.constant 0 : i32
    return %c0_i32, %arg1 : i32, i32
  }
  func.func @transform_3(%arg0: i32, %arg1: i32) -> (i32, i32) {
    %c0_i32 = arith.constant 0 : i32
    return %arg0, %arg1 : i32, i32
  }
}

</mosaic_0001>

<llo_original>
// kernel: tpu_custom_call.1
$region0: #{tpu_custom_call.1}
  #allocation0 [shape = 'u32[]', space=smem, size = 0x4, offset = 0x4, fixed_abs, tag = 'smem constant byte address 0x4 - core index']
  #allocation1 [shape = 'u32[144,128]{1,0:T(1,128)}', space=vmem, size = 0x12000, scoped, tag = 'internal scratch']
  %s0 = inlined_call_operand.hbm [shape: bf16[2,1024], index: 0, kind: input, shape index: {}]
  %s1 = inlined_call_operand.hbm [shape: bf16[1024,256], index: 1, kind: input, shape index: {}]
  %s2 = inlined_call_operand.vmem [shape: f32[1,256], index: 2, kind: input, shape index: {}]
  %s3 = inlined_call_operand.hbm [shape: f32[2,256], index: 3, kind: output, shape index: {}]
  %s4 = sld [smem:[#allocation0]]
  $region53: #{tpu_custom_call.1} parent=0
    _
  %s6 = ssub.s32 1, %s4
  %s7 = scalar_select 0, %s6, %s4
  $region1: #{tpu_custom_call.1} parent=0
    #allocation2 [shape = 'u8[4096]{0}', space=vmem, size = 0x1000, scoped, tag = 'input window, operand 0, single buffered']
    #allocation3 [shape = 's32[2]{0}', space=sflag, size = 0x8, scoped, tag = 'scoped memory for tpu_custom_call.1']
    #allocation4 [shape = 's32[2]{0}', space=sflag, size = 0x8, scoped, tag = 'scoped memory for tpu_custom_call.1']
    #allocation5 [shape = 'u8[524288]{0}', space=vmem, size = 0x80000, scoped, tag = 'input window, operand 1']
    #allocation6 [shape = 's32[2]{0}', space=sflag, size = 0x8, scoped, tag = 'scoped memory for tpu_custom_call.1']
    #allocation7 [shape = 'u8[2048]{0}', space=vmem, size = 0x800, scoped, tag = 'output window, operand 0']
    %8 = vsyncpa [#allocation3], 0
    %9 = vsyncpa [#allocation6], 0
    %s10 = scalar_lea.sflag [#allocation6], 1
    %11 = vsyncpa %s10, 0
    %12 = vsyncpa [#allocation4], 0
    %s13 = scalar_lea.sflag [#allocation4], 1
    %14 = vsyncpa %s13, 0
    loop: start=0, step=1, limit=4
    $region2: #{tpu_custom_call.1} parent=1 // loop_pre_header
      _
    $region3: #{tpu_custom_call.1} parent=1 // loop_header
      %s16 = sphi 0, %s20
      %p17 = scmp.ge.s32.totalorder %s16, 4
      %s23 = sphi 0, %s35
      %s24 = sphi 0, %s31
      %s25 = sphi 0, %s23
      %s26 = sphi 0, %s24
      %s27 = sphi 0, %s25
      %s28 = sphi 0, %s26
      %s38 = sphi 0, %s40
      %s41 = sphi 0, %s38
      %s42 = sphi 0, %s41
      %s58 = sphi 0, %s42
      %s64 = sphi 0, %s66
      %s67 = sphi 0, %s64
      %s68 = sphi 0, %s67
      %s84 = sphi 0, %s68
      %s90 = sphi 0, %s92
      %s93 = sphi 0, %s90
      %s94 = sphi 0, %s93
      %s110 = sphi 0, %s94
      %s118 = sphi 0, %s120
      %s121 = sphi 0, %s118
      %s122 = sphi 0, %s121
      %s138 = sphi 0, %s122
    $region4: #{tpu_custom_call.1} parent=1 // loop_header_branch
      %19 = sbr.rel (%p17) target = $region8
    $region5: #{tpu_custom_call.1} parent=1 // loop_body
      %s21 = ssub.s32 %s16, 1
      %s22 = ssub.s32 %s16, 2
      %s29 = sadd.s32 1, %s24
      %p30 = scmp.ge.s32.totalorder %s29, 2
      %s31 = scalar_select %p30, 0, %s29
      %s32 = sadd.s32 1, %s23
      %s33 = scalar_select %p30, %s32, %s23
      %p34 = scmp.ge.s32.totalorder %s33, 1
      %s35 = scalar_select %p34, 0, %s33
      %s36 = ssub.s32 %s23, %s35
      %p37 = scmp.eq.s32.totalorder %s36, 0
      %s39 = sadd.s32 %s38, 1
      %s40 = scalar_select %p37, %s38, %s39
      %p43 = pneg %p37
      %p44 = scmp.eq.s32.totalorder %s16, 1
      %p45 = por %p43, %p44
      %p46 = scmp.ne.s32.totalorder %s38, %s41
      %p47 = scmp.eq.s32.totalorder %s16, 0
      %p48 = por %p46, %p47
      %p49 = scmp.ne.s32.totalorder %s38, %s41
      %p50 = scmp.eq.s32.totalorder %s21, 1
      %p51 = por %p49, %p50
      %p52 = scmp.ne.s32.totalorder %s41, %s42
      %p53 = scmp.eq.s32.totalorder %s21, 0
      %p54 = por %p52, %p53
      %p55 = scmp.ne.s32.totalorder %s41, %s42
      %p56 = scmp.eq.s32.totalorder %s22, 1
      %p57 = por %p55, %p56
      %p59 = scmp.ne.s32.totalorder %s42, %s58
      %p60 = scmp.eq.s32.totalorder %s22, 0
      %p61 = por %p59, %p60
      %s62 = ssub.s32 %s24, %s31
      %p63 = scmp.eq.s32.totalorder %s62, 0
      %s65 = sadd.s32 %s64, 1
      %s66 = scalar_select %p63, %s64, %s65
      %p69 = pneg %p63
      %p70 = scmp.eq.s32.totalorder %s16, 1
      %p71 = por %p69, %p70
      %p72 = scmp.ne.s32.totalorder %s64, %s67
      %p73 = scmp.eq.s32.totalorder %s16, 0
      %p74 = por %p72, %p73
      %p75 = scmp.ne.s32.totalorder %s64, %s67
      %p76 = scmp.eq.s32.totalorder %s21, 1
      %p77 = por %p75, %p76
      %p78 = scmp.ne.s32.totalorder %s67, %s68
      %p79 = scmp.eq.s32.totalorder %s21, 0
      %p80 = por %p78, %p79
      %p81 = scmp.ne.s32.totalorder %s67, %s68
      %p82 = scmp.eq.s32.totalorder %s22, 1
      %p83 = por %p81, %p82
      %p85 = scmp.ne.s32.totalorder %s68, %s84
      %p86 = scmp.eq.s32.totalorder %s22, 0
      %p87 = por %p85, %p86
      %s88 = ssub.s32 %s24, %s31
      %p89 = scmp.eq.s32.totalorder %s88, 0
      %s91 = sadd.s32 %s90, 1
      %s92 = scalar_select %p89, %s90, %s91
      %p95 = pneg %p89
      %p96 = scmp.eq.s32.totalorder %s16, 1
      %p97 = por %p95, %p96
      %p98 = scmp.ne.s32.totalorder %s90, %s93
      %p99 = scmp.eq.s32.totalorder %s16, 0
      %p100 = por %p98, %p99
      %p101 = scmp.ne.s32.totalorder %s90, %s93
      %p102 = scmp.eq.s32.totalorder %s21, 1
      %p103 = por %p101, %p102
      %p104 = scmp.ne.s32.totalorder %s93, %s94
      %p105 = scmp.eq.s32.totalorder %s21, 0
      %p106 = por %p104, %p105
      %p107 = scmp.ne.s32.totalorder %s93, %s94
      %p108 = scmp.eq.s32.totalorder %s22, 1
      %p109 = por %p107, %p108
      %p111 = scmp.ne.s32.totalorder %s94, %s110
      %p112 = scmp.eq.s32.totalorder %s22, 0
      %p113 = por %p111, %p112
      %s114 = ssub.s32 %s23, %s35
      %s115 = ssub.s32 %s24, %s31
      %s116 = sor.u32 %s114, %s115
      %p117 = scmp.eq.s32.totalorder %s116, 0
      %s119 = sadd.s32 %s118, 1
      %s120 = scalar_select %p117, %s118, %s119
      %p123 = pneg %p117
      %p124 = scmp.eq.s32.totalorder %s16, 1
      %p125 = por %p123, %p124
      %p126 = scmp.ne.s32.totalorder %s118, %s121
      %p127 = scmp.eq.s32.totalorder %s16, 0
      %p128 = por %p126, %p127
      %p129 = scmp.ne.s32.totalorder %s118, %s121
      %p130 = scmp.eq.s32.totalorder %s21, 1
      %p131 = por %p129, %p130
      %p132 = scmp.ne.s32.totalorder %s121, %s122
      %p133 = scmp.eq.s32.totalorder %s21, 0
      %p134 = por %p132, %p133
      %p135 = scmp.ne.s32.totalorder %s121, %s122
      %p136 = scmp.eq.s32.totalorder %s22, 1
      %p137 = por %p135, %p136
      %p139 = scmp.ne.s32.totalorder %s122, %s138
      %p140 = scmp.eq.s32.totalorder %s22, 0
      %p141 = por %p139, %p140
      %p142 = scmp.le.s32.totalorder 1, %s16
      %p143 = scmp.lt.s32.totalorder %s16, 3
      %p144 = pnand %p142, %p143
      %p145 = pneg %p144
      // Predicated region
      $region9: #{tpu_custom_call.1} parent=5 // pred_check
        _
      $region10: #{tpu_custom_call.1} parent=5 // pred_check_branch
        %147 = sbr.rel (%p144) target = $region12
      $region11: #{tpu_custom_call.1} parent=5 // pred_region
        %s148 = ssub.s32 %s16, 1
        // Predicated region
        $region13: #{tpu_custom_call.1} parent=11 // pred_check
          %p149 = pneg %p54
        $region14: #{tpu_custom_call.1} parent=11 // pred_check_branch
          %151 = sbr.rel (%p149) target = $region16
        $region15: #{tpu_custom_call.1} parent=11 // pred_region
          %s153 = ssub.s32 128, 128
          %154 = vsyncadd [#allocation3], %s153
          %s155 = smul.addr %s25, 8
          %s156 = smul.addr %s155, 16
          %s157 = scalar_lea.hbm %s0, %s156
          %s159 = sshll.u32 [#allocation2], 4
          %s160 = int_to_ptr.vmem [resolvable:$true] %s159
          %162 = dma.hbm_to_vmem [thread:$0]  %s157, 128, %s160, [#allocation3]
        $region16: #{tpu_custom_call.1} parent=11 // pred_fallthru
          _
      $region12: #{tpu_custom_call.1} parent=5 // pred_fallthru
        _
      %p163 = scmp.lt.s32.totalorder %s16, 2
      // Predicated region
      $region17: #{tpu_custom_call.1} parent=5 // pred_check
        %p164 = pneg %p163
      $region18: #{tpu_custom_call.1} parent=5 // pred_check_branch
        %166 = sbr.rel (%p164) target = $region20
      $region19: #{tpu_custom_call.1} parent=5 // pred_region
        // Predicated region
        $region21: #{tpu_custom_call.1} parent=19 // pred_check
          %p167 = pneg %p74
        $region22: #{tpu_custom_call.1} parent=19 // pred_check_branch
          %169 = sbr.rel (%p167) target = $region24
        $region23: #{tpu_custom_call.1} parent=19 // pred_region
          %s170 = sand.u32 %s64, 1
          %s171 = scalar_lea.sflag [#allocation6], %s170
          %s172 = sand.u32 %s64, 1
          %s173 = smul.addr %s172, 512
          %s174 = scalar_lea.vmem [#allocation5], %s173
          %s176 = ssub.s32 8192, 8192
          %177 = vsyncadd %s171, %s176
          %s178 = smul.addr %s24, 64
          %s179 = scalar_lea.hbm %s1, %s178
          %s180 = sshll.u32 %s174, 4
          %s181 = int_to_ptr.vmem [resolvable:$true] %s180
          %186 = dma.hbm_to_vmem [thread:$0]  %s179, 8192, %s181, %s171, 128, 64, 4
        $region24: #{tpu_custom_call.1} parent=19 // pred_fallthru
          _
        // Predicated region
        $region25: #{tpu_custom_call.1} parent=19 // pred_check
          %p187 = pneg %p100
        $region26: #{tpu_custom_call.1} parent=19 // pred_check_branch
          %189 = sbr.rel (%p187) target = $region28
        $region27: #{tpu_custom_call.1} parent=19 // pred_region
          %p190 = scmp.lt.s32.totalorder %s24, 1
          %s191 = scalar_select %p190, %s24, 1
          %s192 = scalar_lea.vmem %s2, %s191
        $region28: #{tpu_custom_call.1} parent=19 // pred_fallthru
          _
      $region20: #{tpu_custom_call.1} parent=5 // pred_fallthru
        _
      %p193 = scmp.le.s32.totalorder 1, %s16
      %p194 = scmp.lt.s32.totalorder %s16, 3
      %p195 = pnand %p193, %p194
      %p196 = pneg %p195
      // Predicated region
      $region29: #{tpu_custom_call.1} parent=5 // pred_check
        _
      $region30: #{tpu_custom_call.1} parent=5 // pred_check_branch
        %198 = sbr.rel (%p195) target = $region32
      $region31: #{tpu_custom_call.1} parent=5 // pred_region
        %s199 = ssub.s32 %s16, 1
        // Predicated region
        $region33: #{tpu_custom_call.1} parent=31 // pred_check
          %p200 = pneg %p54
        $region34: #{tpu_custom_call.1} parent=31 // pred_check_branch
          %202 = sbr.rel (%p200) target = $region36
        $region35: #{tpu_custom_call.1} parent=31 // pred_region
          %203 = dma.done [#allocation3], 128
        $region36: #{tpu_custom_call.1} parent=31 // pred_fallthru
          _
        %s204 = sand.u32 %s67, 1
        %s205 = scalar_lea.sflag [#allocation6], %s204
        %s206 = sand.u32 %s67, 1
        %s207 = smul.addr %s206, 512
        %s208 = scalar_lea.vmem [#allocation5], %s207
        // Predicated region
        $region37: #{tpu_custom_call.1} parent=31 // pred_check
          %p209 = pneg %p80
        $region38: #{tpu_custom_call.1} parent=31 // pred_check_branch
          %211 = sbr.rel (%p209) target = $region40
        $region39: #{tpu_custom_call.1} parent=31 // pred_region
          %212 = dma.done %s205, 8192
        $region40: #{tpu_custom_call.1} parent=31 // pred_fallthru
          _
        %p213 = pneg %p54
        %p214 = pneg %p51
        %s215 = sand.u32 %s67, 1
        %s216 = scalar_lea.sflag [#allocation6], %s215
        %s217 = sand.u32 %s67, 1
        %s218 = smul.addr %s217, 512
        %s219 = scalar_lea.vmem [#allocation5], %s218
        %p220 = pneg %p80
        %p221 = pneg %p77
        %p222 = scmp.lt.s32.totalorder %s26, 1
        %s223 = scalar_select %p222, %s26, 1
        %s224 = scalar_lea.vmem %s2, %s223
        %p225 = pneg %p106
        %p226 = pneg %p103
        %p227 = pneg %p134
        %p228 = pneg %p131
        %s229 = sand.u32 %s121, 1
        %s230 = scalar_lea.sflag [#allocation4], %s229
        %s231 = sand.u32 %s121, 1
        %s232 = smul.addr %s231, 2
        %s233 = scalar_lea.vmem [#allocation7], %s232
        %p234 = scmp.lt.s32.totalorder %s26, 1
        %s235 = scalar_select %p234, %s26, 1
        %s236 = scalar_lea.vmem %s2, %s235
        %v238 = vld [vmem:[#allocation2] sm:$0xff]
        %v239 = vld [vmem:[%s208] sm:$0xf]
        %v240 = vld [vmem:[%s208 + $0x4] sm:$0xf]
        %v241 = vld [vmem:[%s208 + $0x8] sm:$0xf]
        %v242 = vld [vmem:[%s208 + $0xc] sm:$0xf]
        %v243 = vld [vmem:[%s208 + $0x10] sm:$0xf]
        %v244 = vld [vmem:[%s208 + $0x14] sm:$0xf]
        %v245 = vld [vmem:[%s208 + $0x18] sm:$0xf]
        %v246 = vld [vmem:[%s208 + $0x1c] sm:$0xf]
        %v247 = vld [vmem:[%s208 + $0x20] sm:$0xf]
        %v248 = vld [vmem:[%s208 + $0x24] sm:$0xf]
        %v249 = vld [vmem:[%s208 + $0x28] sm:$0xf]
        %v250 = vld [vmem:[%s208 + $0x2c] sm:$0xf]
        %v251 = vld [vmem:[%s208 + $0x30] sm:$0xf]
        %v252 = vld [vmem:[%s208 + $0x34] sm:$0xf]
        %v253 = vld [vmem:[%s208 + $0x38] sm:$0xf]
        %v254 = vld [vmem:[%s208 + $0x3c] sm:$0xf]
        %v255 = vld [vmem:[%s208 + $0x40] sm:$0xf]
        %v256 = vld [vmem:[%s208 + $0x44] sm:$0xf]
        %v257 = vld [vmem:[%s208 + $0x48] sm:$0xf]
        %v258 = vld [vmem:[%s208 + $0x4c] sm:$0xf]
        %v259 = vld [vmem:[%s208 + $0x50] sm:$0xf]
        %v260 = vld [vmem:[%s208 + $0x54] sm:$0xf]
        %v261 = vld [vmem:[%s208 + $0x58] sm:$0xf]
        %v262 = vld [vmem:[%s208 + $0x5c] sm:$0xf]
        %v263 = vld [vmem:[%s208 + $0x60] sm:$0xf]
        %v264 = vld [vmem:[%s208 + $0x64] sm:$0xf]
        %v265 = vld [vmem:[%s208 + $0x68] sm:$0xf]
        %v266 = vld [vmem:[%s208 + $0x6c] sm:$0xf]
        %v267 = vld [vmem:[%s208 + $0x70] sm:$0xf]
        %v268 = vld [vmem:[%s208 + $0x74] sm:$0xf]
        %v269 = vld [vmem:[%s208 + $0x78] sm:$0xf]
        %v270 = vld [vmem:[%s208 + $0x7c] sm:$0xf]
        %v271 = vld [vmem:[%s208 + $0x80] sm:$0xf]
        %v272 = vld [vmem:[%s208 + $0x84] sm:$0xf]
        %v273 = vld [vmem:[%s208 + $0x88] sm:$0xf]
        %v274 = vld [vmem:[%s208 + $0x8c] sm:$0xf]
        %v275 = vld [vmem:[%s208 + $0x90] sm:$0xf]
        %v276 = vld [vmem:[%s208 + $0x94] sm:$0xf]
        %v277 = vld [vmem:[%s208 + $0x98] sm:$0xf]
        %v278 = vld [vmem:[%s208 + $0x9c] sm:$0xf]
        %v279 = vld [vmem:[%s208 + $0xa0] sm:$0xf]
        %v280 = vld [vmem:[%s208 + $0xa4] sm:$0xf]
        %v281 = vld [vmem:[%s208 + $0xa8] sm:$0xf]
        %v282 = vld [vmem:[%s208 + $0xac] sm:$0xf]
        %v283 = vld [vmem:[%s208 + $0xb0] sm:$0xf]
        %v284 = vld [vmem:[%s208 + $0xb4] sm:$0xf]
        %v285 = vld [vmem:[%s208 + $0xb8] sm:$0xf]
        %v286 = vld [vmem:[%s208 + $0xbc] sm:$0xf]
        %v287 = vld [vmem:[%s208 + $0xc0] sm:$0xf]
        %v288 = vld [vmem:[%s208 + $0xc4] sm:$0xf]
        %v289 = vld [vmem:[%s208 + $0xc8] sm:$0xf]
        %v290 = vld [vmem:[%s208 + $0xcc] sm:$0xf]
        %v291 = vld [vmem:[%s208 + $0xd0] sm:$0xf]
        %v292 = vld [vmem:[%s208 + $0xd4] sm:$0xf]
        %v293 = vld [vmem:[%s208 + $0xd8] sm:$0xf]
        %v294 = vld [vmem:[%s208 + $0xdc] sm:$0xf]
        %v295 = vld [vmem:[%s208 + $0xe0] sm:$0xf]
        %v296 = vld [vmem:[%s208 + $0xe4] sm:$0xf]
        %v297 = vld [vmem:[%s208 + $0xe8] sm:$0xf]
        %v298 = vld [vmem:[%s208 + $0xec] sm:$0xf]
        %v299 = vld [vmem:[%s208 + $0xf0] sm:$0xf]
        %v300 = vld [vmem:[%s208 + $0xf4] sm:$0xf]
        %v301 = vld [vmem:[%s208 + $0xf8] sm:$0xf]
        %v302 = vld [vmem:[%s208 + $0xfc] sm:$0xf]
        %v303 = vld [vmem:[%s208 + $0x100] sm:$0xf]
        %v304 = vld [vmem:[%s208 + $0x104] sm:$0xf]
        %v305 = vld [vmem:[%s208 + $0x108] sm:$0xf]
        %v306 = vld [vmem:[%s208 + $0x10c] sm:$0xf]
        %v307 = vld [vmem:[%s208 + $0x110] sm:$0xf]
        %v308 = vld [vmem:[%s208 + $0x114] sm:$0xf]
        %v309 = vld [vmem:[%s208 + $0x118] sm:$0xf]
        %v310 = vld [vmem:[%s208 + $0x11c] sm:$0xf]
        %v311 = vld [vmem:[%s208 + $0x120] sm:$0xf]
        %v312 = vld [vmem:[%s208 + $0x124] sm:$0xf]
        %v313 = vld [vmem:[%s208 + $0x128] sm:$0xf]
        %v314 = vld [vmem:[%s208 + $0x12c] sm:$0xf]
        %v315 = vld [vmem:[%s208 + $0x130] sm:$0xf]
        %v316 = vld [vmem:[%s208 + $0x134] sm:$0xf]
        %v317 = vld [vmem:[%s208 + $0x138] sm:$0xf]
        %v318 = vld [vmem:[%s208 + $0x13c] sm:$0xf]
        %v319 = vld [vmem:[%s208 + $0x140] sm:$0xf]
        %v320 = vld [vmem:[%s208 + $0x144] sm:$0xf]
        %v321 = vld [vmem:[%s208 + $0x148] sm:$0xf]
        %v322 = vld [vmem:[%s208 + $0x14c] sm:$0xf]
        %v323 = vld [vmem:[%s208 + $0x150] sm:$0xf]
        %v324 = vld [vmem:[%s208 + $0x154] sm:$0xf]
        %v325 = vld [vmem:[%s208 + $0x158] sm:$0xf]
        %v326 = vld [vmem:[%s208 + $0x15c] sm:$0xf]
        %v327 = vld [vmem:[%s208 + $0x160] sm:$0xf]
        %v328 = vld [vmem:[%s208 + $0x164] sm:$0xf]
        %v329 = vld [vmem:[%s208 + $0x168] sm:$0xf]
        %v330 = vld [vmem:[%s208 + $0x16c] sm:$0xf]
        %v331 = vld [vmem:[%s208 + $0x170] sm:$0xf]
        %v332 = vld [vmem:[%s208 + $0x174] sm:$0xf]
        %v333 = vld [vmem:[%s208 + $0x178] sm:$0xf]
        %v334 = vld [vmem:[%s208 + $0x17c] sm:$0xf]
        %v335 = vld [vmem:[%s208 + $0x180] sm:$0xf]
        %v336 = vld [vmem:[%s208 + $0x184] sm:$0xf]
        %v337 = vld [vmem:[%s208 + $0x188] sm:$0xf]
        %v338 = vld [vmem:[%s208 + $0x18c] sm:$0xf]
        %v339 = vld [vmem:[%s208 + $0x190] sm:$0xf]
        %v340 = vld [vmem:[%s208 + $0x194] sm:$0xf]
        %v341 = vld [vmem:[%s208 + $0x198] sm:$0xf]
        %v342 = vld [vmem:[%s208 + $0x19c] sm:$0xf]
        %v343 = vld [vmem:[%s208 + $0x1a0] sm:$0xf]
        %v344 = vld [vmem:[%s208 + $0x1a4] sm:$0xf]
        %v345 = vld [vmem:[%s208 + $0x1a8] sm:$0xf]
        %v346 = vld [vmem:[%s208 + $0x1ac] sm:$0xf]
        %v347 = vld [vmem:[%s208 + $0x1b0] sm:$0xf]
        %v348 = vld [vmem:[%s208 + $0x1b4] sm:$0xf]
        %v349 = vld [vmem:[%s208 + $0x1b8] sm:$0xf]
        %v350 = vld [vmem:[%s208 + $0x1bc] sm:$0xf]
        %v351 = vld [vmem:[%s208 + $0x1c0] sm:$0xf]
        %v352 = vld [vmem:[%s208 + $0x1c4] sm:$0xf]
        %v353 = vld [vmem:[%s208 + $0x1c8] sm:$0xf]
        %v354 = vld [vmem:[%s208 + $0x1cc] sm:$0xf]
        %v355 = vld [vmem:[%s208 + $0x1d0] sm:$0xf]
        %v356 = vld [vmem:[%s208 + $0x1d4] sm:$0xf]
        %v357 = vld [vmem:[%s208 + $0x1d8] sm:$0xf]
        %v358 = vld [vmem:[%s208 + $0x1dc] sm:$0xf]
        %v359 = vld [vmem:[%s208 + $0x1e0] sm:$0xf]
        %v360 = vld [vmem:[%s208 + $0x1e4] sm:$0xf]
        %v361 = vld [vmem:[%s208 + $0x1e8] sm:$0xf]
        %v362 = vld [vmem:[%s208 + $0x1ec] sm:$0xf]
        %v363 = vld [vmem:[%s208 + $0x1f0] sm:$0xf]
        %v364 = vld [vmem:[%s208 + $0x1f4] sm:$0xf]
        %v365 = vld [vmem:[%s208 + $0x1f8] sm:$0xf]
        %v366 = vld [vmem:[%s208 + $0x1fc] sm:$0xf]
        %v368 = vcombine.high %v238, %v238
        %v370 = vunpack.c.l.s4 1966171168
        %v371 = vunpack.c.0.s8 %v370
        %v372 = vlaneseq
        %v373 = vshrl.u32 %v372, 7
        %v374 = vsub.s32 %v371, %v373
        %v375 = vrot.slane %v238, %v374
        %v377 = vunpack.c.l.s4 1966171168
        %v378 = vunpack.c.0.s8 %v377
        %v379 = vlaneseq
        %v380 = vshrl.u32 %v379, 7
        %v381 = vsub.s32 %v378, %v380
        %v382 = vrot.slane %v368, %v381
        %v383 = vcombine.high %v375, %v375
        %v384 = vcombine.high %v382, %v382
        %v386 = vunpack.c.l.s4 1966171168
        %v387 = vunpack.c.0.s8 %v386
        %v388 = vlaneseq
        %v389 = vshrl.u32 %v388, 7
        %v390 = vsub.s32 %v387, %v389
        %v391 = vrot.slane %v375, %v390
        %v393 = vunpack.c.l.s4 1966171168
        %v394 = vunpack.c.0.s8 %v393
        %v395 = vlaneseq
        %v396 = vshrl.u32 %v395, 7
        %v397 = vsub.s32 %v394, %v396
        %v398 = vrot.slane %v382, %v397
        %v400 = vunpack.c.l.s4 1966171168
        %v401 = vunpack.c.0.s8 %v400
        %v402 = vlaneseq
        %v403 = vshrl.u32 %v402, 7
        %v404 = vsub.s32 %v401, %v403
        %v405 = vrot.slane %v383, %v404
        %v407 = vunpack.c.l.s4 1966171168
        %v408 = vunpack.c.0.s8 %v407
        %v409 = vlaneseq
        %v410 = vshrl.u32 %v409, 7
        %v411 = vsub.s32 %v408, %v410
        %v412 = vrot.slane %v384, %v411
        %v413 = vcombine.high %v391, %v391
        %v414 = vcombine.high %v398, %v398
        %v415 = vcombine.high %v405, %v405
        %v416 = vcombine.high %v412, %v412
        %v553 = vunpack.c.l.b16 %v239
        %v554 = vunpack.c.l.b16 %v240
        %v555 = vunpack.c.l.b16 %v241
        %v556 = vunpack.c.l.b16 %v242
        %v557 = vunpack.c.l.b16 %v243
        %v558 = vunpack.c.l.b16 %v244
        %v559 = vunpack.c.l.b16 %v245
        %v560 = vunpack.c.l.b16 %v246
        %v561 = vunpack.c.l.b16 %v247
        %v562 = vunpack.c.l.b16 %v248
        %v563 = vunpack.c.l.b16 %v249
        %v564 = vunpack.c.l.b16 %v250
        %v565 = vunpack.c.l.b16 %v251
        %v566 = vunpack.c.l.b16 %v252
        %v567 = vunpack.c.l.b16 %v253
        %v568 = vunpack.c.l.b16 %v254
        %v569 = vunpack.c.l.b16 %v255
        %v570 = vunpack.c.l.b16 %v256
        %v571 = vunpack.c.l.b16 %v257
        %v572 = vunpack.c.l.b16 %v258
        %v573 = vunpack.c.l.b16 %v259
        %v574 = vunpack.c.l.b16 %v260
        %v575 = vunpack.c.l.b16 %v261
        %v576 = vunpack.c.l.b16 %v262
        %v577 = vunpack.c.l.b16 %v263
        %v578 = vunpack.c.l.b16 %v264
        %v579 = vunpack.c.l.b16 %v265
        %v580 = vunpack.c.l.b16 %v266
        %v581 = vunpack.c.l.b16 %v267
        %v582 = vunpack.c.l.b16 %v268
        %v583 = vunpack.c.l.b16 %v269
        %v584 = vunpack.c.l.b16 %v270
        %v585 = vunpack.c.l.b16 %v271
        %v586 = vunpack.c.l.b16 %v272
        %v587 = vunpack.c.l.b16 %v273
        %v588 = vunpack.c.l.b16 %v274
        %v589 = vunpack.c.l.b16 %v275
        %v590 = vunpack.c.l.b16 %v276
        %v591 = vunpack.c.l.b16 %v277
        %v592 = vunpack.c.l.b16 %v278
        %v593 = vunpack.c.l.b16 %v279
        %v594 = vunpack.c.l.b16 %v280
        %v595 = vunpack.c.l.b16 %v281
        %v596 = vunpack.c.l.b16 %v282
        %v597 = vunpack.c.l.b16 %v283
        %v598 = vunpack.c.l.b16 %v284
        %v599 = vunpack.c.l.b16 %v285
        %v600 = vunpack.c.l.b16 %v286
        %v601 = vunpack.c.l.b16 %v287
        %v602 = vunpack.c.l.b16 %v288
        %v603 = vunpack.c.l.b16 %v289
        %v604 = vunpack.c.l.b16 %v290
        %v605 = vunpack.c.l.b16 %v291
        %v606 = vunpack.c.l.b16 %v292
        %v607 = vunpack.c.l.b16 %v293
        %v608 = vunpack.c.l.b16 %v294
        %v609 = vunpack.c.l.b16 %v295
        %v610 = vunpack.c.l.b16 %v296
        %v611 = vunpack.c.l.b16 %v297
        %v612 = vunpack.c.l.b16 %v298
        %v613 = vunpack.c.l.b16 %v299
        %v614 = vunpack.c.l.b16 %v300
        %v615 = vunpack.c.l.b16 %v301
        %v616 = vunpack.c.l.b16 %v302
        %v617 = vunpack.c.l.b16 %v303
        %v618 = vunpack.c.l.b16 %v304
        %v619 = vunpack.c.l.b16 %v305
        %v620 = vunpack.c.l.b16 %v306
        %v621 = vunpack.c.l.b16 %v307
        %v622 = vunpack.c.l.b16 %v308
        %v623 = vunpack.c.l.b16 %v309
        %v624 = vunpack.c.l.b16 %v310
        %v625 = vunpack.c.l.b16 %v311
        %v626 = vunpack.c.l.b16 %v312
        %v627 = vunpack.c.l.b16 %v313
        %v628 = vunpack.c.l.b16 %v314
        %v629 = vunpack.c.l.b16 %v315
        %v630 = vunpack.c.l.b16 %v316
        %v631 = vunpack.c.l.b16 %v317
        %v632 = vunpack.c.l.b16 %v318
        %v633 = vunpack.c.l.b16 %v319
        %v634 = vunpack.c.l.b16 %v320
        %v635 = vunpack.c.l.b16 %v321
        %v636 = vunpack.c.l.b16 %v322
        %v637 = vunpack.c.l.b16 %v323
        %v638 = vunpack.c.l.b16 %v324
        %v639 = vunpack.c.l.b16 %v325
        %v640 = vunpack.c.l.b16 %v326
        %v641 = vunpack.c.l.b16 %v327
        %v642 = vunpack.c.l.b16 %v328
        %v643 = vunpack.c.l.b16 %v329
        %v644 = vunpack.c.l.b16 %v330
        %v645 = vunpack.c.l.b16 %v331
        %v646 = vunpack.c.l.b16 %v332
        %v647 = vunpack.c.l.b16 %v333
        %v648 = vunpack.c.l.b16 %v334
        %v649 = vunpack.c.l.b16 %v335
        %v650 = vunpack.c.l.b16 %v336
        %v651 = vunpack.c.l.b16 %v337
        %v652 = vunpack.c.l.b16 %v338
        %v653 = vunpack.c.l.b16 %v339
        %v654 = vunpack.c.l.b16 %v340
        %v655 = vunpack.c.l.b16 %v341
        %v656 = vunpack.c.l.b16 %v342
        %v657 = vunpack.c.l.b16 %v343
        %v658 = vunpack.c.l.b16 %v344
        %v659 = vunpack.c.l.b16 %v345
        %v660 = vunpack.c.l.b16 %v346
        %v661 = vunpack.c.l.b16 %v347
        %v662 = vunpack.c.l.b16 %v348
        %v663 = vunpack.c.l.b16 %v349
        %v664 = vunpack.c.l.b16 %v350
        %v665 = vunpack.c.l.b16 %v351
        %v666 = vunpack.c.l.b16 %v352
        %v667 = vunpack.c.l.b16 %v353
        %v668 = vunpack.c.l.b16 %v354
        %v669 = vunpack.c.l.b16 %v355
        %v670 = vunpack.c.l.b16 %v356
        %v671 = vunpack.c.l.b16 %v357
        %v672 = vunpack.c.l.b16 %v358
        %v673 = vunpack.c.l.b16 %v359
        %v674 = vunpack.c.l.b16 %v360
        %v675 = vunpack.c.l.b16 %v361
        %v676 = vunpack.c.l.b16 %v362
        %v677 = vunpack.c.l.b16 %v363
        %v678 = vunpack.c.l.b16 %v364
        %v679 = vunpack.c.l.b16 %v365
        %v680 = vunpack.c.l.b16 %v366
        %v681 = vpack.c.b16 %v554, %v553
        %v682 = vpack.c.b16 %v556, %v555
        %v683 = vpack.c.b16 %v558, %v557
        %v684 = vpack.c.b16 %v560, %v559
        %v685 = vpack.c.b16 %v562, %v561
        %v686 = vpack.c.b16 %v564, %v563
        %v687 = vpack.c.b16 %v566, %v565
        %v688 = vpack.c.b16 %v568, %v567
        %v689 = vpack.c.b16 %v570, %v569
        %v690 = vpack.c.b16 %v572, %v571
        %v691 = vpack.c.b16 %v574, %v573
        %v692 = vpack.c.b16 %v576, %v575
        %v693 = vpack.c.b16 %v578, %v577
        %v694 = vpack.c.b16 %v580, %v579
        %v695 = vpack.c.b16 %v582, %v581
        %v696 = vpack.c.b16 %v584, %v583
        %v697 = vpack.c.b16 %v586, %v585
        %v698 = vpack.c.b16 %v588, %v587
        %v699 = vpack.c.b16 %v590, %v589
        %v700 = vpack.c.b16 %v592, %v591
        %v701 = vpack.c.b16 %v594, %v593
        %v702 = vpack.c.b16 %v596, %v595
        %v703 = vpack.c.b16 %v598, %v597
        %v704 = vpack.c.b16 %v600, %v599
        %v705 = vpack.c.b16 %v602, %v601
        %v706 = vpack.c.b16 %v604, %v603
        %v707 = vpack.c.b16 %v606, %v605
        %v708 = vpack.c.b16 %v608, %v607
        %v709 = vpack.c.b16 %v610, %v609
        %v710 = vpack.c.b16 %v612, %v611
        %v711 = vpack.c.b16 %v614, %v613
        %v712 = vpack.c.b16 %v616, %v615
        %v713 = vpack.c.b16 %v618, %v617
        %v714 = vpack.c.b16 %v620, %v619
        %v715 = vpack.c.b16 %v622, %v621
        %v716 = vpack.c.b16 %v624, %v623
        %v717 = vpack.c.b16 %v626, %v625
        %v718 = vpack.c.b16 %v628, %v627
        %v719 = vpack.c.b16 %v630, %v629
        %v720 = vpack.c.b16 %v632, %v631
        %v721 = vpack.c.b16 %v634, %v633
        %v722 = vpack.c.b16 %v636, %v635
        %v723 = vpack.c.b16 %v638, %v637
        %v724 = vpack.c.b16 %v640, %v639
        %v725 = vpack.c.b16 %v642, %v641
        %v726 = vpack.c.b16 %v644, %v643
        %v727 = vpack.c.b16 %v646, %v645
        %v728 = vpack.c.b16 %v648, %v647
        %v729 = vpack.c.b16 %v650, %v649
        %v730 = vpack.c.b16 %v652, %v651
        %v731 = vpack.c.b16 %v654, %v653
        %v732 = vpack.c.b16 %v656, %v655
        %v733 = vpack.c.b16 %v658, %v657
        %v734 = vpack.c.b16 %v660, %v659
        %v735 = vpack.c.b16 %v662, %v661
        %v736 = vpack.c.b16 %v664, %v663
        %v737 = vpack.c.b16 %v666, %v665
        %v738 = vpack.c.b16 %v668, %v667
        %v739 = vpack.c.b16 %v670, %v669
        %v740 = vpack.c.b16 %v672, %v671
        %v741 = vpack.c.b16 %v674, %v673
        %v742 = vpack.c.b16 %v676, %v675
        %v743 = vpack.c.b16 %v678, %v677
        %v744 = vpack.c.b16 %v680, %v679
        %809 = vmatprep.subr.bf16.mxu0 0
        %810 = vmatpush1.bf16.msra.mxu0 %v681
        %811 = vmatprep.subr.bf16.mxu0 0
        %812 = vmatpush1.bf16.msra.mxu0 %v682
        %813 = vmatprep.subr.bf16.mxu0 0
        %814 = vmatpush1.bf16.msra.mxu0 %v683
        %815 = vmatprep.subr.bf16.mxu0 0
        %816 = vmatpush1.bf16.msra.mxu0 %v684
        %817 = vmatprep.subr.bf16.mxu0 0
        %818 = vmatpush1.bf16.msra.mxu0 %v685
        %819 = vmatprep.subr.bf16.mxu0 0
        %820 = vmatpush1.bf16.msra.mxu0 %v686
        %821 = vmatprep.subr.bf16.mxu0 0
        %822 = vmatpush1.bf16.msra.mxu0 %v687
        %823 = vmatprep.subr.bf16.mxu0 0
        %824 = vmatpush1.bf16.msra.mxu0 %v688
        %825 = vmatprep.subr.bf16.mxu0 0
        %826 = vmatpush1.bf16.msra.mxu0 %v689
        %827 = vmatprep.subr.bf16.mxu0 0
        %828 = vmatpush1.bf16.msra.mxu0 %v690
        %829 = vmatprep.subr.bf16.mxu0 0
        %830 = vmatpush1.bf16.msra.mxu0 %v691
        %831 = vmatprep.subr.bf16.mxu0 0
        %832 = vmatpush1.bf16.msra.mxu0 %v692
        %833 = vmatprep.subr.bf16.mxu0 0
        %834 = vmatpush1.bf16.msra.mxu0 %v693
        %835 = vmatprep.subr.bf16.mxu0 0
        %836 = vmatpush1.bf16.msra.mxu0 %v694
        %837 = vmatprep.subr.bf16.mxu0 0
        %838 = vmatpush1.bf16.msra.mxu0 %v695
        %839 = vmatprep.subr.bf16.mxu0 0
        %840 = vmatpush1.bf16.msra.mxu0 %v696
        %841 = vmatprep.mubr.bf16.mxu0 %v405
        %842 = vmatmul.mubr.bf16.gmra.mrb[0].mxu0 %v391
        %v843 = vpop.f32.mrb[0].mxu0
        %v844 = vadd.f32 0.0, %v843
        %v845 = vpop.f32.mrb[0].mxu0
        %v846 = vpop.f32.mrb[0].mxu0
        %v847 = vpop.f32.mrb[0].mxu0
        %848 = vdwg.mxu0
        %849 = vmatprep.subr.bf16.mxu0 0
        %850 = vmatpush1.bf16.msra.mxu0 %v697
        %851 = vmatprep.subr.bf16.mxu0 0
        %852 = vmatpush1.bf16.msra.mxu0 %v698
        %853 = vmatprep.subr.bf16.mxu0 0
        %854 = vmatpush1.bf16.msra.mxu0 %v699
        %855 = vmatprep.subr.bf16.mxu0 0
        %856 = vmatpush1.bf16.msra.mxu0 %v700
        %857 = vmatprep.subr.bf16.mxu0 0
        %858 = vmatpush1.bf16.msra.mxu0 %v701
        %859 = vmatprep.subr.bf16.mxu0 0
        %860 = vmatpush1.bf16.msra.mxu0 %v702
        %861 = vmatprep.subr.bf16.mxu0 0
        %862 = vmatpush1.bf16.msra.mxu0 %v703
        %863 = vmatprep.subr.bf16.mxu0 0
        %864 = vmatpush1.bf16.msra.mxu0 %v704
        %865 = vmatprep.subr.bf16.mxu0 0
        %866 = vmatpush1.bf16.msra.mxu0 %v705
        %867 = vmatprep.subr.bf16.mxu0 0
        %868 = vmatpush1.bf16.msra.mxu0 %v706
        %869 = vmatprep.subr.bf16.mxu0 0
        %870 = vmatpush1.bf16.msra.mxu0 %v707
        %871 = vmatprep.subr.bf16.mxu0 0
        %872 = vmatpush1.bf16.msra.mxu0 %v708
        %873 = vmatprep.subr.bf16.mxu0 0
        %874 = vmatpush1.bf16.msra.mxu0 %v709
        %875 = vmatprep.subr.bf16.mxu0 0
        %876 = vmatpush1.bf16.msra.mxu0 %v710
        %877 = vmatprep.subr.bf16.mxu0 0
        %878 = vmatpush1.bf16.msra.mxu0 %v711
        %879 = vmatprep.subr.bf16.mxu0 0
        %880 = vmatpush1.bf16.msra.mxu0 %v712
        %881 = vmatprep.mubr.bf16.mxu0 %v415
        %882 = vmatmul.mubr.bf16.gmra.mrb[0].mxu0 %v413
        %v883 = vpop.f32.mrb[0].mxu0
        %v884 = vadd.f32 %v844, %v883
        %v885 = vpop.f32.mrb[0].mxu0
        %v886 = vpop.f32.mrb[0].mxu0
        %v887 = vpop.f32.mrb[0].mxu0
        %888 = vdwg.mxu0
        %889 = vmatprep.subr.bf16.mxu0 0
        %890 = vmatpush1.bf16.msra.mxu0 %v713
        %891 = vmatprep.subr.bf16.mxu0 0
        %892 = vmatpush1.bf16.msra.mxu0 %v714
        %893 = vmatprep.subr.bf16.mxu0 0
        %894 = vmatpush1.bf16.msra.mxu0 %v715
        %895 = vmatprep.subr.bf16.mxu0 0
        %896 = vmatpush1.bf16.msra.mxu0 %v716
        %897 = vmatprep.subr.bf16.mxu0 0
        %898 = vmatpush1.bf16.msra.mxu0 %v717
        %899 = vmatprep.subr.bf16.mxu0 0
        %900 = vmatpush1.bf16.msra.mxu0 %v718
        %901 = vmatprep.subr.bf16.mxu0 0
        %902 = vmatpush1.bf16.msra.mxu0 %v719
        %903 = vmatprep.subr.bf16.mxu0 0
        %904 = vmatpush1.bf16.msra.mxu0 %v720
        %905 = vmatprep.subr.bf16.mxu0 0
        %906 = vmatpush1.bf16.msra.mxu0 %v721
        %907 = vmatprep.subr.bf16.mxu0 0
        %908 = vmatpush1.bf16.msra.mxu0 %v722
        %909 = vmatprep.subr.bf16.mxu0 0
        %910 = vmatpush1.bf16.msra.mxu0 %v723
        %911 = vmatprep.subr.bf16.mxu0 0
        %912 = vmatpush1.bf16.msra.mxu0 %v724
        %913 = vmatprep.subr.bf16.mxu0 0
        %914 = vmatpush1.bf16.msra.mxu0 %v725
        %915 = vmatprep.subr.bf16.mxu0 0
        %916 = vmatpush1.bf16.msra.mxu0 %v726
        %917 = vmatprep.subr.bf16.mxu0 0
        %918 = vmatpush1.bf16.msra.mxu0 %v727
        %919 = vmatprep.subr.bf16.mxu0 0
        %920 = vmatpush1.bf16.msra.mxu0 %v728
        %921 = vmatprep.mubr.bf16.mxu0 %v412
        %922 = vmatmul.mubr.bf16.gmra.mrb[0].mxu0 %v398
        %v923 = vpop.f32.mrb[0].mxu0
        %v924 = vadd.f32 %v884, %v923
        %v925 = vpop.f32.mrb[0].mxu0
        %v926 = vpop.f32.mrb[0].mxu0
        %v927 = vpop.f32.mrb[0].mxu0
        %928 = vdwg.mxu0
        %929 = vmatprep.subr.bf16.mxu0 0
        %930 = vmatpush1.bf16.msra.mxu0 %v729
        %931 = vmatprep.subr.bf16.mxu0 0
        %932 = vmatpush1.bf16.msra.mxu0 %v730
        %933 = vmatprep.subr.bf16.mxu0 0
        %934 = vmatpush1.bf16.msra.mxu0 %v731
        %935 = vmatprep.subr.bf16.mxu0 0
        %936 = vmatpush1.bf16.msra.mxu0 %v732
        %937 = vmatprep.subr.bf16.mxu0 0
        %938 = vmatpush1.bf16.msra.mxu0 %v733
        %939 = vmatprep.subr.bf16.mxu0 0
        %940 = vmatpush1.bf16.msra.mxu0 %v734
        %941 = vmatprep.subr.bf16.mxu0 0
        %942 = vmatpush1.bf16.msra.mxu0 %v735
        %943 = vmatprep.subr.bf16.mxu0 0
        %944 = vmatpush1.bf16.msra.mxu0 %v736
        %945 = vmatprep.subr.bf16.mxu0 0
        %946 = vmatpush1.bf16.msra.mxu0 %v737
        %947 = vmatprep.subr.bf16.mxu0 0
        %948 = vmatpush1.bf16.msra.mxu0 %v738
        %949 = vmatprep.subr.bf16.mxu0 0
        %950 = vmatpush1.bf16.msra.mxu0 %v739
        %951 = vmatprep.subr.bf16.mxu0 0
        %952 = vmatpush1.bf16.msra.mxu0 %v740
        %953 = vmatprep.subr.bf16.mxu0 0
        %954 = vmatpush1.bf16.msra.mxu0 %v741
        %955 = vmatprep.subr.bf16.mxu0 0
        %956 = vmatpush1.bf16.msra.mxu0 %v742
        %957 = vmatprep.subr.bf16.mxu0 0
        %958 = vmatpush1.bf16.msra.mxu0 %v743
        %959 = vmatprep.subr.bf16.mxu0 0
        %960 = vmatpush1.bf16.msra.mxu0 %v744
        %961 = vmatprep.mubr.bf16.mxu0 %v416
        %962 = vmatmul.mubr.bf16.gmra.mrb[0].mxu0 %v414
        %v963 = vpop.f32.mrb[0].mxu0
        %v964 = vadd.f32 %v924, %v963
        %v965 = vpop.f32.mrb[0].mxu0
        %v966 = vpop.f32.mrb[0].mxu0
        %v967 = vpop.f32.mrb[0].mxu0
        %968 = vdwg.mxu0
        %v969 = vmul.f32 %v964, 0.00044194172
        %v970 = vld [vmem:[%s236] sm:$0x1]
        %v972 = vlaneseq
        %v973 = vshrl.u32 %v972, 7
        %v974 = vsub.s32 0, %v973
        %v975 = vrot.slane %v970, %v974
        %v977 = vadd.f32 %v969, %v975
        %vm978 = vcmp.ge.f32.partialorder %v977, 0.0
        %v979 = vmul.f32 %v977, 0.2
        %v980 = vsel %vm978, %v977, %v979
        %981 = vst [vmem:[%s233] sm:$0x3] %v980
        %s982 = sand.u32 %s121, 1
        %s983 = scalar_lea.sflag [#allocation4], %s982
        %s984 = sand.u32 %s121, 1
        %s985 = smul.addr %s984, 2
        %s986 = scalar_lea.vmem [#allocation7], %s985
        // Predicated region
        $region41: #{tpu_custom_call.1} parent=31 // pred_check
          %p987 = pneg %p131
        $region42: #{tpu_custom_call.1} parent=31 // pred_check_branch
          %989 = sbr.rel (%p987) target = $region44
        $region43: #{tpu_custom_call.1} parent=31 // pred_region
          %s991 = ssub.s32 32, 32
          %992 = vsyncadd %s983, %s991
          %s993 = smul.addr %s25, 2
          %s994 = sadd.s32 %s26, %s993
          %s995 = smul.addr %s994, 32
          %s996 = scalar_lea.hbm %s3, %s995
          %s998 = sshll.u32 %s986, 4
          %s999 = int_to_ptr.vmem [resolvable:$true] %s998
          %1001 = dma.vmem_to_hbm [thread:$0]  %s999, 32, %s996, %s983
        $region44: #{tpu_custom_call.1} parent=31 // pred_fallthru
          _
      $region32: #{tpu_custom_call.1} parent=5 // pred_fallthru
        _
      %p1002 = scmp.le.s32.totalorder 2, %s16
      // Predicated region
      $region45: #{tpu_custom_call.1} parent=5 // pred_check
        %p1003 = pneg %p1002
      $region46: #{tpu_custom_call.1} parent=5 // pred_check_branch
        %1005 = sbr.rel (%p1003) target = $region48
      $region47: #{tpu_custom_call.1} parent=5 // pred_region
        %s1006 = ssub.s32 %s16, 2
        // Predicated region
        $region49: #{tpu_custom_call.1} parent=47 // pred_check
          %p1007 = pneg %p137
        $region50: #{tpu_custom_call.1} parent=47 // pred_check_branch
          %1009 = sbr.rel (%p1007) target = $region52
        $region51: #{tpu_custom_call.1} parent=47 // pred_region
          %s1010 = sand.u32 %s122, 1
          %s1011 = scalar_lea.sflag [#allocation4], %s1010
          %s1012 = sand.u32 %s122, 1
          %s1013 = smul.addr %s1012, 2
          %s1014 = scalar_lea.vmem [#allocation7], %s1013
          %1015 = dma.done %s1011, 32
        $region52: #{tpu_custom_call.1} parent=47 // pred_fallthru
          _
      $region48: #{tpu_custom_call.1} parent=5 // pred_fallthru
        _
    $region6: #{tpu_custom_call.1} parent=1 // loop_footer
      %s20 = sadd.s32 1, %s16
    $region7: #{tpu_custom_call.1} parent=1 // loop_footer_branch
      %15 = sbr.rel target = $region3
    $region8: #{tpu_custom_call.1} parent=1 // loop_exit
      _
    %1016 = vsyncpa [#allocation3], 1
    %s1017 = scalar_lea.sflag [#allocation3], 1
    %1018 = vsyncpa %s1017, 1
    %1019 = vsyncpa [#allocation6], 1
    %s1020 = scalar_lea.sflag [#allocation6], 1
    %1021 = vsyncpa %s1020, 1
    %1022 = vsyncpa [#allocation4], 1
    %s1023 = scalar_lea.sflag [#allocation4], 1
    %1024 = vsyncpa %s1023, 1

</llo_original>
